<compile_context>
chip_gen: v6e
topology: v6e:2x2x1
jax: 0.10.0
libtpu: 0.0.40
codegen_flags: <defaults>
</compile_context>

<pallas_src>
import jax
import jax.numpy as jnp
from jax import lax
from jax.experimental import pallas as pl
from jax.experimental.pallas import tpu as pltpu

IN_FEATURES = 85
OUT_FEATURES = 5
MAX_BATCH_TILE = 1024  # rows per grid step; multiple of 8, VMEM-safe on all gens


def _linear_kernel(x_ref, w_ref, b_ref, o_ref):
    # x: (TB, 85), w: (5, 85) -> contract the 85-axes on the MXU, f32 accum.
    x = x_ref[...]
    w = w_ref[...]
    acc = lax.dot_general(
        x, w,
        dimension_numbers=(((1,), (1,)), ((), ())),
        preferred_element_type=jnp.float32,
    )  # (TB, 5)
    o_ref[...] = (acc + b_ref[...]).astype(o_ref.dtype)


def shallow_stupid_net_forward(x, weight, bias, *, max_tile=MAX_BATCH_TILE):
    """Forward pass of ShallowStupidNet.

    Args:
      x:      (B, 1, IN_FEATURES) float32 (PyTorch-style input).
      weight: (OUT_FEATURES, IN_FEATURES) float32 (nn.Linear.weight layout).
      bias:   (OUT_FEATURES,) float32.

    Returns:
      logits: (B, OUT_FEATURES) float32.
    """
    b_sz = x.shape[0]
    x2d = x.reshape(b_sz, IN_FEATURES)          # squeeze(1)
    bias2d = bias.reshape(1, OUT_FEATURES)

    # Batch tile: multiple of 8 (sublane rule), capped at max_tile.
    b_pad8 = ((b_sz + 7) // 8) * 8
    tb = min(max_tile, b_pad8)
    b_padded = ((b_sz + tb - 1) // tb) * tb     # pad B to a multiple of tb
    if b_padded != b_sz:
        x2d = jnp.pad(x2d, ((0, b_padded - b_sz), (0, 0)))

    grid = (b_padded // tb,)

    cost = pl.CostEstimate(
        flops=2 * b_padded * IN_FEATURES * OUT_FEATURES,
        transcendentals=0,
        bytes_accessed=(
            b_padded * (IN_FEATURES + OUT_FEATURES) * 4
            + IN_FEATURES * OUT_FEATURES * 4
            + OUT_FEATURES * 4
        ),
    )

    out = pl.pallas_call(
        _linear_kernel,
        out_shape=jax.ShapeDtypeStruct((b_padded, OUT_FEATURES), x.dtype),
        grid_spec=pltpu.PrefetchScalarGridSpec(
            num_scalar_prefetch=0,
            grid=grid,
            in_specs=[
                # x: one batch tile per grid step (double-buffered by Pallas).
                pl.BlockSpec((tb, IN_FEATURES), lambda i: (i, 0)),
                # weight / bias: full arrays, constant index_map -> VMEM-resident.
                pl.BlockSpec((OUT_FEATURES, IN_FEATURES), lambda i: (0, 0)),
                pl.BlockSpec((1, OUT_FEATURES), lambda i: (0, 0)),
            ],
            out_specs=pl.BlockSpec((tb, OUT_FEATURES), lambda i: (i, 0)),
        ),
        compiler_params=pltpu.CompilerParams(
            dimension_semantics=("parallel",)),
        cost_estimate=cost,
    )(x2d, weight, bias2d)

    return out[:b_sz]


def init_params(key):
    """Deterministic init matching nn.Linear(85, 5) shapes (Kaiming-uniform-ish)."""
    kw, kb = jax.random.split(key)
    bound = 1.0 / (IN_FEATURES ** 0.5)
    weight = jax.random.uniform(
        kw, (OUT_FEATURES, IN_FEATURES), jnp.float32, -bound, bound)
    bias = jax.random.uniform(
        kb, (OUT_FEATURES,), jnp.float32, -bound, bound)
    return weight, bias


if __name__ == "__main__":
    key = jax.random.PRNGKey(0)
    k_x, k_x2, k_p = jax.random.split(key, 3)

    weight, bias = init_params(k_p)

    # Small-shape check (single tile, padded 2 -> 8 rows internally).
    batch = 2
    x = jax.random.normal(k_x, (batch, 1, IN_FEATURES), dtype=jnp.float32)
    logits = jax.block_until_ready(shallow_stupid_net_forward(x, weight, bias))
    ref = (x.reshape(batch, IN_FEATURES) @ weight.T) + bias
    assert logits.shape == (batch, OUT_FEATURES)
    assert jnp.allclose(logits, ref, atol=1e-5, rtol=1e-5)

    # Multi-tile + ragged-batch check (exercises tiling/padding path).
    batch2 = 2051
    x2 = jax.random.normal(k_x2, (batch2, 1, IN_FEATURES), dtype=jnp.float32)
    logits2 = jax.block_until_ready(shallow_stupid_net_forward(x2, weight, bias))
    ref2 = (x2.reshape(batch2, IN_FEATURES) @ weight.T) + bias
    assert logits2.shape == (batch2, OUT_FEATURES)
    assert jnp.allclose(logits2, ref2, atol=1e-5, rtol=1e-5)

    print("KERNEL_OK")
</pallas_src>

<mosaic_0001>
module attributes {stable_mosaic.version = 11 : i64} {
  func.func @_linear_kernel(%arg0: i32, %arg1: memref<8x85xf32, #tpu.memory_space<vmem>>, %arg2: memref<5x85xf32, #tpu.memory_space<vmem>>, %arg3: memref<1x5xf32, #tpu.memory_space<vmem>>, %arg4: memref<8x5xf32, #tpu.memory_space<vmem>>) attributes {dimension_semantics = [#tpu.dimension_semantics<parallel>], iteration_bounds = array<i64: 1>, scalar_prefetch = 0 : i64, scratch_operands = 0 : i64, tpu.core_type = #tpu.core_type<tc>, window_params = [{transform_indices = @transform_0, window_bounds = array<i64: 8, 85>}, {pipeline_mode = #tpu.pipeline_mode<synchronous>, transform_indices = @transform_1, window_bounds = array<i64: 5, 85>}, {pipeline_mode = #tpu.pipeline_mode<synchronous>, transform_indices = @transform_2, window_bounds = array<i64: 1, 5>}, {transform_indices = @transform_3, window_bounds = array<i64: 8, 5>}]} {
    %c0 = arith.constant 0 : index
    %c0_0 = arith.constant 0 : index
    %0 = vector.load %arg1[%c0, %c0_0] : memref<8x85xf32, #tpu.memory_space<vmem>>, vector<8x85xf32>
    %c0_1 = arith.constant 0 : index
    %c0_2 = arith.constant 0 : index
    %1 = vector.load %arg2[%c0_1, %c0_2] : memref<5x85xf32, #tpu.memory_space<vmem>>, vector<5x85xf32>
    %cst = arith.constant dense<0.000000e+00> : vector<8x5xf32>
    %2 = tpu.matmul %0, %1, %cst {dimension_numbers = #tpu.dot_dimension_numbers<[1], [1], [0], [0], [0, 0, 1, 0], [], []>} : vector<8x85xf32>, vector<5x85xf32>, vector<8x5xf32> -> vector<8x5xf32>
    %c0_3 = arith.constant 0 : index
    %c0_4 = arith.constant 0 : index
    %3 = vector.load %arg3[%c0_3, %c0_4] : memref<1x5xf32, #tpu.memory_space<vmem>>, vector<1x5xf32>
    %4 = vector.broadcast %3 : vector<1x5xf32> to vector<8x5xf32>
    %5 = arith.addf %2, %4 : vector<8x5xf32>
    %c0_5 = arith.constant 0 : index
    %c0_6 = arith.constant 0 : index
    %6 = vector.load %arg4[%c0_5, %c0_6] : memref<8x5xf32, #tpu.memory_space<vmem>>, vector<8x5xf32>
    tpu.vector_store %arg4[%c0_5, %c0_6], %5 {strides = array<i32>} : memref<8x5xf32, #tpu.memory_space<vmem>>, vector<8x5xf32>,
    return
  }
  func.func @transform_0(%arg0: i32) -> (i32, i32) {
    %c0_i32 = arith.constant 0 : i32
    %c0_i32_0 = arith.constant 0 : i32
    return %arg0, %c0_i32 : i32, i32
  }
  func.func @transform_1(%arg0: i32) -> (i32, i32) {
    %c0_i32 = arith.constant 0 : i32
    %c0_i32_0 = arith.constant 0 : i32
    %c0_i32_1 = arith.constant 0 : i32
    return %c0_i32, %c0_i32_0 : i32, i32
  }
  func.func @transform_2(%arg0: i32) -> (i32, i32) {
    %c0_i32 = arith.constant 0 : i32
    %c0_i32_0 = arith.constant 0 : i32
    %c0_i32_1 = arith.constant 0 : i32
    return %c0_i32, %c0_i32_0 : i32, i32
  }
  func.func @transform_3(%arg0: i32) -> (i32, i32) {
    %c0_i32 = arith.constant 0 : i32
    %c0_i32_0 = arith.constant 0 : i32
    return %arg0, %c0_i32 : i32, i32
  }
}

</mosaic_0001>

<llo_original>
// kernel: tpu_custom_call.1
$region0: #{tpu_custom_call.1}
  #allocation0 [shape = 'u32[]', space=smem, size = 0x4, offset = 0x4, fixed_abs, tag = 'smem constant byte address 0x4 - core index']
  #allocation1 [shape = 'u32[144,128]{1,0:T(1,128)}', space=vmem, size = 0x12000, scoped, tag = 'internal scratch']
  %s0 = inlined_call_operand.hbm [shape: f32[8,85], index: 0, kind: input, shape index: {}]
  %s1 = inlined_call_operand.hbm [shape: f32[5,85], index: 1, kind: input, shape index: {}]
  %s2 = inlined_call_operand.vmem [shape: f32[1,5], index: 2, kind: input, shape index: {}]
  %s3 = inlined_call_operand.hbm [shape: f32[8,5], index: 3, kind: output, shape index: {}]
  %s4 = sld [smem:[#allocation0]]
  $region30: #{tpu_custom_call.1} parent=0
    _
  %s6 = ssub.s32 1, %s4
  %s7 = scalar_select 0, %s6, %s4
  $region1: #{tpu_custom_call.1} parent=0
    #allocation2 [shape = 'u8[4096]{0}', space=vmem, size = 0x1000, scoped, tag = 'input window, operand 0, single buffered']
    #allocation3 [shape = 's32[1]{0}', space=sflag, size = 0x4, scoped, tag = 'scoped memory for tpu_custom_call.1']
    #allocation4 [shape = 's32[1]{0}', space=sflag, size = 0x4, scoped, tag = 'scoped memory for tpu_custom_call.1']
    #allocation5 [shape = 'u8[4096]{0}', space=vmem, size = 0x1000, scoped, tag = 'input window, operand 1, single buffered']
    #allocation6 [shape = 's32[1]{0}', space=sflag, size = 0x4, scoped, tag = 'scoped memory for tpu_custom_call.1']
    #allocation7 [shape = 'u8[4096]{0}', space=vmem, size = 0x1000, scoped, tag = 'output window, operand 0, single buffered']
    %8 = vsyncpa [#allocation3], 0
    %9 = vsyncpa [#allocation6], 0
    %10 = vsyncpa [#allocation4], 0
    // Predicated region
    $region2: #{tpu_custom_call.1} parent=1 // pred_check
      _
    $region3: #{tpu_custom_call.1} parent=1 // pred_check_branch
      %12 = sbr.rel (0) target = $region5
    $region4: #{tpu_custom_call.1} parent=1 // pred_region
      %s14 = ssub.s32 128, 128
      %15 = vsyncadd [#allocation3], %s14
      %s17 = sshll.u32 [#allocation2], 4
      %s18 = int_to_ptr.vmem [resolvable:$true] %s17
      %20 = dma.hbm_to_vmem [thread:$0]  %s0, 128, %s18, [#allocation3]
    $region5: #{tpu_custom_call.1} parent=1 // pred_fallthru
      _
    // Predicated region
    $region6: #{tpu_custom_call.1} parent=1 // pred_check
      _
    $region7: #{tpu_custom_call.1} parent=1 // pred_check_branch
      %22 = sbr.rel (0) target = $region9
    $region8: #{tpu_custom_call.1} parent=1 // pred_region
      %s24 = ssub.s32 128, 128
      %25 = vsyncadd [#allocation6], %s24
      %s27 = sshll.u32 [#allocation5], 4
      %s28 = int_to_ptr.vmem [resolvable:$true] %s27
      %30 = dma.hbm_to_vmem [thread:$0]  %s1, 128, %s28, [#allocation6]
    $region9: #{tpu_custom_call.1} parent=1 // pred_fallthru
      _
    // Predicated region
    $region10: #{tpu_custom_call.1} parent=1 // pred_check
      _
    $region11: #{tpu_custom_call.1} parent=1 // pred_check_branch
      %32 = sbr.rel (0) target = $region13
    $region12: #{tpu_custom_call.1} parent=1 // pred_region
      _
    $region13: #{tpu_custom_call.1} parent=1 // pred_fallthru
      _
    // Predicated region
    $region14: #{tpu_custom_call.1} parent=1 // pred_check
      _
    $region15: #{tpu_custom_call.1} parent=1 // pred_check_branch
      %34 = sbr.rel (0) target = $region17
    $region16: #{tpu_custom_call.1} parent=1 // pred_region
      %35 = dma.done [#allocation3], 128
    $region17: #{tpu_custom_call.1} parent=1 // pred_fallthru
      _
    // Predicated region
    $region18: #{tpu_custom_call.1} parent=1 // pred_check
      _
    $region19: #{tpu_custom_call.1} parent=1 // pred_check_branch
      %37 = sbr.rel (0) target = $region21
    $region20: #{tpu_custom_call.1} parent=1 // pred_region
      %38 = dma.done [#allocation6], 128
    $region21: #{tpu_custom_call.1} parent=1 // pred_fallthru
      _
    %v39 = vld [vmem:[#allocation2] sm:$0xff]
    %v40 = vld [vmem:[#allocation5] sm:$0x1f]
    %v41 = vld [vmem:[%s2] sm:$0x1]
    %v43 = vlaneseq
    %v44 = vshrl.u32 %v43, 7
    %v45 = vsub.s32 0, %v44
    %v46 = vrot.slane %v41, %v45
    %vm48 = vcmask 695296
    %v50 = vsel %vm48, %v39, 0
    %v53 = vsel %vm48, %v40, 0
    %55 = vmatprep.subr.mxu0 0.0
    %56 = vmatpush1.xpose.msra.mxu0 0.0
    %57 = vmatprep.subr.mxu0 0.0
    %58 = vmatpush1.xpose.msra.mxu0 0.0
    %59 = vmatprep.subr.mxu0 0.0
    %60 = vmatpush1.xpose.msra.mxu0 0.0
    %61 = vmatprep.subr.mxu0 0.0
    %62 = vmatpush1.xpose.msra.mxu0 0.0
    %63 = vmatprep.subr.mxu0 0.0
    %64 = vmatpush1.xpose.msra.mxu0 0.0
    %65 = vmatprep.subr.mxu0 0.0
    %66 = vmatpush1.xpose.msra.mxu0 0.0
    %67 = vmatprep.subr.mxu0 0.0
    %68 = vmatpush1.xpose.msra.mxu0 0.0
    %69 = vmatprep.subr.mxu0 0.0
    %70 = vmatpush1.xpose.msra.mxu0 0.0
    %71 = vmatprep.subr.mxu0 0.0
    %72 = vmatpush1.xpose.msra.mxu0 0.0
    %73 = vmatprep.subr.mxu0 0.0
    %74 = vmatpush1.xpose.msra.mxu0 0.0
    %75 = vmatprep.subr.mxu0 0.0
    %76 = vmatpush1.xpose.msra.mxu0 0.0
    %77 = vmatprep.subr.mxu0 0.0
    %78 = vmatpush1.xpose.msra.mxu0 0.0
    %79 = vmatprep.subr.mxu0 0.0
    %80 = vmatpush1.xpose.msra.mxu0 0.0
    %81 = vmatprep.subr.mxu0 0.0
    %82 = vmatpush1.xpose.msra.mxu0 0.0
    %83 = vmatprep.subr.mxu0 0.0
    %84 = vmatpush1.xpose.msra.mxu0 0.0
    %85 = vmatprep.subr.mxu0 0.0
    %86 = vmatpush1.xpose.msra.mxu0 %v53
    %87 = vmatprep.subr.mxu0 0.0
    %88 = vmatpush2.xpose.msra.mxu0 0.0
    %89 = vmatprep.subr.mxu0 0.0
    %90 = vmatpush2.xpose.msra.mxu0 0.0
    %91 = vmatprep.subr.mxu0 0.0
    %92 = vmatpush2.xpose.msra.mxu0 0.0
    %93 = vmatprep.subr.mxu0 0.0
    %94 = vmatpush2.xpose.msra.mxu0 0.0
    %95 = vmatprep.subr.mxu0 0.0
    %96 = vmatpush2.xpose.msra.mxu0 0.0
    %97 = vmatprep.subr.mxu0 0.0
    %98 = vmatpush2.xpose.msra.mxu0 0.0
    %99 = vmatprep.subr.mxu0 0.0
    %100 = vmatpush2.xpose.msra.mxu0 0.0
    %101 = vmatprep.subr.mxu0 0.0
    %102 = vmatpush2.xpose.msra.mxu0 0.0
    %103 = vmatprep.subr.mxu0 0.0
    %104 = vmatpush2.xpose.msra.mxu0 0.0
    %105 = vmatprep.subr.mxu0 0.0
    %106 = vmatpush2.xpose.msra.mxu0 0.0
    %107 = vmatprep.subr.mxu0 0.0
    %108 = vmatpush2.xpose.msra.mxu0 0.0
    %109 = vmatprep.subr.mxu0 0.0
    %110 = vmatpush2.xpose.msra.mxu0 0.0
    %111 = vmatprep.subr.mxu0 0.0
    %112 = vmatpush2.xpose.msra.mxu0 0.0
    %113 = vmatprep.subr.mxu0 0.0
    %114 = vmatpush2.xpose.msra.mxu0 0.0
    %115 = vmatprep.subr.mxu0 0.0
    %116 = vmatpush2.xpose.msra.mxu0 0.0
    %117 = vmatprep.subr.mxu0 0.0
    %118 = vmatpush2.xpose.msra.mxu0 0.0
    %119 = vmatprep.mubr.f32.mxu0 0.0
    %120 = vmatmul.mubr.f32.gmra.mxu0 %v50
    %v121 = vpop.f32.mrf.mxu0
    %v122 = vadd.f32 %v46, %v121
    %v123 = vpop.f32.mrf.mxu0
    %124 = vdwg.mxu0
    %vm125 = vcmask 39936
    %126 = vst.msk [vmem:[#allocation7] sm:$0xff] %vm125, %v122
    // Predicated region
    $region22: #{tpu_custom_call.1} parent=1 // pred_check
      _
    $region23: #{tpu_custom_call.1} parent=1 // pred_check_branch
      %128 = sbr.rel (0) target = $region25
    $region24: #{tpu_custom_call.1} parent=1 // pred_region
      %s130 = ssub.s32 128, 128
      %131 = vsyncadd [#allocation4], %s130
      %s133 = sshll.u32 [#allocation7], 4
      %s134 = int_to_ptr.vmem [resolvable:$true] %s133
      %136 = dma.vmem_to_hbm [thread:$0]  %s134, 128, %s3, [#allocation4]
    $region25: #{tpu_custom_call.1} parent=1 // pred_fallthru
      _
    // Predicated region
    $region26: #{tpu_custom_call.1} parent=1 // pred_check
      _
    $region27: #{tpu_custom_call.1} parent=1 // pred_check_branch
      %138 = sbr.rel (0) target = $region29
    $region28: #{tpu_custom_call.1} parent=1 // pred_region
      %139 = dma.done [#allocation4], 128
    $region29: #{tpu_custom_call.1} parent=1 // pred_fallthru
      _
    %140 = vsyncpa [#allocation3], 1
    %141 = vsyncpa [#allocation6], 1
    %142 = vsyncpa [#allocation4], 1

</llo_original>
